<compile_context>
chip_gen: v5e
topology: v5e:2x2
jax: 0.10.0
libtpu: 0.0.40
codegen_flags: <defaults>
</compile_context>

<pallas_src>
import functools

import jax
import jax.numpy as jnp
from jax.experimental import pallas as pl
from jax.experimental.pallas import tpu as pltpu


def _round_up(n, m):
    return ((n + m - 1) // m) * m


def _use_bf16_epilogue():
    """bf16 VPU epilogue only on chips with native bf16 VALUs (v6e / v7x)."""
    try:
        kind = jax.devices()[0].device_kind.lower()
    except Exception:
        return False
    return ("v6" in kind) or ("v7" in kind)


def _cnn_regressor_kernel(
    x_ref,                        # (TB, inputs*2) f32
    w0_ref, b0_ref,               # Conv1d(inputs, 256, 2) -> (inputs*2, 256), (1, 256)
    w1_ref, b1_ref,               # Conv1d(256, 128, 1)    -> (256, 128), (1, 128)
    w2_ref, b2_ref,               # Conv1d(128, 128, 1)    -> (128, 128), (1, 128)
    wl1_ref, bl1_ref,             # Linear(128, 64)        -> (128, 64), (1, 64)
    wl2_ref, bl2_ref,             # Linear(64, 32)         -> (64, 32), (1, 32)
    wl3a_ref, wl3b_ref, bl3_ref,  # Linear(34, 16) split   -> (32, 16), (inputs*2, 16), (1, 16)
    wo_ref, bo_ref,               # Linear(16, outputs), lane-dense padded -> (16, 128), (1, 128)
    out_ref,                      # (TB, 128) f32
    *, bf16_epilogue,
):
    bf16 = jnp.bfloat16
    f32 = jnp.float32

    def dense_relu(h_bf16, w_ref, b_ref):
        # bf16 operands into the MXU, f32 accumulation.
        acc = jnp.dot(h_bf16, w_ref[...], preferred_element_type=f32)
        if bf16_epilogue:
            # v6e / v7x: bias-add + ReLU in bf16 (native bf16 VALUs), feed the
            # next dot directly.
            return jnp.maximum(acc.astype(bf16) + b_ref[...].astype(bf16), 0)
        # v5e: f32 epilogue (no bf16 VALUs), cast for the next dot.
        return jnp.maximum(acc + b_ref[...], 0.0).astype(bf16)

    xb = x_ref[...].astype(bf16)

    # input_layer (Conv1d k=2 on a length-2 input) + ReLU.
    h = dense_relu(xb, w0_ref, b0_ref)
    # max_pooling_layer = MaxPool1d(1): identity on a length-1 sequence.

    # conv_layer1 (1x1) + ReLU, conv_layer2 (1x1) + ReLU.
    h = dense_relu(h, w1_ref, b1_ref)
    h = dense_relu(h, w2_ref, b2_ref)
    # TODO(synk): BN_id=True path (BatchNorm1d over the (B,128,1,1) view) not
    # implemented; the default forward (BN_id=False) skips it.

    # flatten is a no-op ((TB, 128, 1) -> (TB, 128)); linear_layer_1/2 + ReLU.
    h = dense_relu(h, wl1_ref, bl1_ref)
    h = dense_relu(h, wl2_ref, bl2_ref)

    # cat((h, supp), 1) @ Wl3 == h @ wl3a + x_flat @ wl3b_full (supp columns
    # folded into the x tile, zero elsewhere) + bias, then ReLU.
    h3 = (jnp.dot(h, wl3a_ref[...], preferred_element_type=f32)
          + jnp.dot(xb, wl3b_ref[...], preferred_element_type=f32)
          + bl3_ref[...])
    h3 = jnp.maximum(h3, 0.0).astype(bf16)

    # output_layer (no activation), lane-dense padded to 128 columns.
    out_ref[...] = (jnp.dot(h3, wo_ref[...], preferred_element_type=f32)
                    + bo_ref[...])


def make_params(key, inputs, outputs,
                conv1_out_channels=256, conv2_out_channels=128,
                linear1_out_features=64, linear2_out_features=32):
    """Deterministic synthetic parameters in PyTorch layout, pre-arranged for
    the kernel: (in, out) bf16 weights, (1, out) f32 biases."""
    def dense(k, out_f, in_f, scale=0.05):
        kw, kb = jax.random.split(k)
        w = scale * jax.random.normal(kw, (out_f, in_f), jnp.float32)   # torch (out, in)
        b = scale * jax.random.normal(kb, (out_f,), jnp.float32)
        return w.T.astype(jnp.bfloat16), b[None, :]                     # (in, out) bf16, (1, out) f32

    ks = jax.random.split(key, 8)
    # Conv1d(inputs, 256, 2): torch weight (256, inputs, 2) -> flatten last two dims.
    w0, b0 = dense(ks[0], conv1_out_channels, inputs * 2)
    w1, b1 = dense(ks[1], conv2_out_channels, conv1_out_channels)        # Conv1d(256,128,1)
    w2, b2 = dense(ks[2], 128, conv2_out_channels)                       # Conv1d(128,128,1)
    wl1, bl1 = dense(ks[3], linear1_out_features, 128)                   # Linear(128,64)
    wl2, bl2 = dense(ks[4], linear2_out_features, linear1_out_features)  # Linear(64,32)
    wl3, bl3 = dense(ks[5], 16, linear2_out_features + 2)                # Linear(34,16)
    wl3a = wl3[:linear2_out_features, :]      # multiplies the (B,32) hidden
    wl3b = wl3[linear2_out_features:, :]      # multiplies supp = x[:, -2:, 1]
    # Fold supp into the x_flat stream: supp columns in x_flat (channel-major,
    # kernel-pos minor) are 2*(inputs-2)+1 and 2*(inputs-1)+1.
    wl3b_full = jnp.zeros((inputs * 2, 16), jnp.bfloat16)
    wl3b_full = wl3b_full.at[2 * (inputs - 2) + 1, :].set(wl3b[0])
    wl3b_full = wl3b_full.at[2 * (inputs - 1) + 1, :].set(wl3b[1])
    wo, bo = dense(ks[6], outputs, 16)                                   # Linear(16,outputs)
    # Lane-dense output: zero-pad to a multiple of 128 columns.
    out_cols = _round_up(max(outputs, 1), 128)
    wo = jnp.pad(wo, ((0, 0), (0, out_cols - outputs)))
    bo = jnp.pad(bo, ((0, 0), (0, out_cols - outputs)))
    return (w0, b0, w1, b1, w2, b2, wl1, bl1, wl2, bl2, wl3a, wl3b_full, bl3, wo, bo)


@functools.partial(jax.jit,
                   static_argnames=("inputs", "outputs", "block_b", "bf16_epilogue"))
def cnn_regressor_forward(x, params, *, inputs, outputs, block_b=2048,
                          bf16_epilogue=False):
    """x: (B, inputs, 2) float32, NCW layout like the PyTorch module."""
    B = x.shape[0]
    x = x.reshape(B, inputs, -1)                 # mirrors input.reshape((B, inputs, -1))
    x_flat = x.reshape(B, inputs * 2)            # (b, c, k) flatten matches W.reshape(out, in*k)
    out_cols = params[-2].shape[1]               # lane-dense padded output width (>= 128)

    # Batch tile: multiple of 16 (bf16 MXU LHS row packing), capped at block_b,
    # and capped at ceil(B/2) so the grid has >= 2 steps whenever B allows it
    # (keeps both v7x TensorCores busy; harmless on single-TC v5e/v6e).
    block_b = max(16, _round_up(block_b, 16))
    tb = min(block_b, max(16, _round_up(pl.cdiv(B, 2), 16)))
    b_pad = _round_up(B, tb)
    if b_pad != B:
        x_flat = jnp.pad(x_flat, ((0, b_pad - B), (0, 0)))
    grid = (b_pad // tb,)

    def resident_spec(arr):
        # Full-extent block, constant index_map -> stays VMEM-resident across
        # the whole batch grid (no per-step weight DMA).
        return pl.BlockSpec(arr.shape, lambda i: (0, 0))

    in_specs = ([pl.BlockSpec((tb, inputs * 2), lambda i: (i, 0))]
                + [resident_spec(p) for p in params])
    out_spec = pl.BlockSpec((tb, out_cols), lambda i: (i, 0))

    kernel = functools.partial(_cnn_regressor_kernel, bf16_epilogue=bf16_epilogue)
    out = pl.pallas_call(
        kernel,
        out_shape=jax.ShapeDtypeStruct((b_pad, out_cols), jnp.float32),
        grid=grid,
        in_specs=in_specs,
        out_specs=out_spec,
        compiler_params=pltpu.CompilerParams(
            dimension_semantics=("parallel",),      # shard batch tiles across TCs on v7x
            vmem_limit_bytes=32 * 1024 * 1024,      # lift v5e's 16 MiB default scoped VMEM
        ),
    )(x_flat, *params)
    # Padded rows/columns contain bias->ReLU garbage; slice before any reduction.
    return out[:B, :outputs]


def reference_forward(x, params, inputs, outputs, bf16_epilogue=False):
    """Pure-JAX reference mirroring the PyTorch forward (BN_id=False) with the
    same bf16-operand / f32-accumulate arithmetic as the kernel, using the
    explicit supp concat path (checks the supp-folding in the kernel)."""
    (w0, b0, w1, b1, w2, b2, wl1, bl1, wl2, bl2, wl3a, wl3b_full, bl3, wo, bo) = params
    bf16, f32 = jnp.bfloat16, jnp.float32

    def dense_relu(h, w, b):
        acc = jnp.dot(h.astype(bf16), w, preferred_element_type=f32)
        if bf16_epilogue:
            return jnp.maximum(acc.astype(bf16) + b.astype(bf16), 0).astype(f32)
        return jnp.maximum(acc + b, 0.0)

    B = x.shape[0]
    x = x.reshape(B, inputs, -1)
    supp = x[:, -2:, 1]
    wl3b = wl3b_full[jnp.array([2 * (inputs - 2) + 1, 2 * (inputs - 1) + 1]), :]
    h = dense_relu(x.reshape(B, inputs * 2), w0, b0)
    h = dense_relu(h, w1, b1)
    h = dense_relu(h, w2, b2)
    h = dense_relu(h, wl1, bl1)
    h = dense_relu(h, wl2, bl2)
    h3 = (jnp.dot(h.astype(bf16), wl3a, preferred_element_type=f32)
          + jnp.dot(supp.astype(bf16), wl3b, preferred_element_type=f32)
          + bl3)
    h3 = jnp.maximum(h3, 0.0)
    out = jnp.dot(h3.astype(bf16), wo, preferred_element_type=f32) + bo
    return out[:, :outputs]


if __name__ == "__main__":
    INPUTS, OUTPUTS = 4, 3
    key = jax.random.PRNGKey(0)
    kx1, kx2, kp = jax.random.split(key, 3)
    params = make_params(kp, INPUTS, OUTPUTS)
    bf16_epi = _use_bf16_epilogue()

    # Small-shape check (B=2), PyTorch NCW layout: (batch, channels=inputs, length=2).
    x_small = jax.random.normal(kx1, (2, INPUTS, 2), jnp.float32)
    out_small = jax.block_until_ready(
        cnn_regressor_forward(x_small, params, inputs=INPUTS, outputs=OUTPUTS,
                              bf16_epilogue=bf16_epi))
    ref_small = reference_forward(x_small, params, INPUTS, OUTPUTS, bf16_epi)
    assert out_small.shape == (2, OUTPUTS)
    assert jnp.allclose(out_small, ref_small, atol=1e-2, rtol=1e-2)

    # Multi-step grid + padding check (B=200, block_b=64 -> tb=64, 4 grid steps).
    x_big = jax.random.normal(kx2, (200, INPUTS, 2), jnp.float32)
    out_big = jax.block_until_ready(
        cnn_regressor_forward(x_big, params, inputs=INPUTS, outputs=OUTPUTS,
                              block_b=64, bf16_epilogue=bf16_epi))
    ref_big = reference_forward(x_big, params, INPUTS, OUTPUTS, bf16_epi)
    assert out_big.shape == (200, OUTPUTS)
    assert jnp.allclose(out_big, ref_big, atol=1e-2, rtol=1e-2)

    print("KERNEL_OK")
</pallas_src>

<mosaic_0001>
module attributes {stable_mosaic.version = 11 : i64} {
  func.func @_cnn_regressor_kernel(%arg0: i32, %arg1: memref<16x8xf32, #tpu.memory_space<vmem>>, %arg2: memref<8x256xbf16, #tpu.memory_space<vmem>>, %arg3: memref<1x256xf32, #tpu.memory_space<vmem>>, %arg4: memref<256x128xbf16, #tpu.memory_space<vmem>>, %arg5: memref<1x128xf32, #tpu.memory_space<vmem>>, %arg6: memref<128x128xbf16, #tpu.memory_space<vmem>>, %arg7: memref<1x128xf32, #tpu.memory_space<vmem>>, %arg8: memref<128x64xbf16, #tpu.memory_space<vmem>>, %arg9: memref<1x64xf32, #tpu.memory_space<vmem>>, %arg10: memref<64x32xbf16, #tpu.memory_space<vmem>>, %arg11: memref<1x32xf32, #tpu.memory_space<vmem>>, %arg12: memref<32x16xbf16, #tpu.memory_space<vmem>>, %arg13: memref<8x16xbf16, #tpu.memory_space<vmem>>, %arg14: memref<1x16xf32, #tpu.memory_space<vmem>>, %arg15: memref<16x128xbf16, #tpu.memory_space<vmem>>, %arg16: memref<1x128xf32, #tpu.memory_space<vmem>>, %arg17: memref<16x128xf32, #tpu.memory_space<vmem>>) attributes {dimension_semantics = [#tpu.dimension_semantics<parallel>], iteration_bounds = array<i64: 1>, scalar_prefetch = 0 : i64, scratch_operands = 0 : i64, tpu.core_type = #tpu.core_type<tc>, window_params = [{transform_indices = @transform_0, window_bounds = array<i64: 16, 8>}, {pipeline_mode = #tpu.pipeline_mode<synchronous>, transform_indices = @transform_1, window_bounds = array<i64: 8, 256>}, {pipeline_mode = #tpu.pipeline_mode<synchronous>, transform_indices = @transform_2, window_bounds = array<i64: 1, 256>}, {pipeline_mode = #tpu.pipeline_mode<synchronous>, transform_indices = @transform_3, window_bounds = array<i64: 256, 128>}, {pipeline_mode = #tpu.pipeline_mode<synchronous>, transform_indices = @transform_4, window_bounds = array<i64: 1, 128>}, {pipeline_mode = #tpu.pipeline_mode<synchronous>, transform_indices = @transform_5, window_bounds = array<i64: 128, 128>}, {pipeline_mode = #tpu.pipeline_mode<synchronous>, transform_indices = @transform_6, window_bounds = array<i64: 1, 128>}, {pipeline_mode = #tpu.pipeline_mode<synchronous>, transform_indices = @transform_7, window_bounds = array<i64: 128, 64>}, {pipeline_mode = #tpu.pipeline_mode<synchronous>, transform_indices = @transform_8, window_bounds = array<i64: 1, 64>}, {pipeline_mode = #tpu.pipeline_mode<synchronous>, transform_indices = @transform_9, window_bounds = array<i64: 64, 32>}, {pipeline_mode = #tpu.pipeline_mode<synchronous>, transform_indices = @transform_10, window_bounds = array<i64: 1, 32>}, {pipeline_mode = #tpu.pipeline_mode<synchronous>, transform_indices = @transform_11, window_bounds = array<i64: 32, 16>}, {pipeline_mode = #tpu.pipeline_mode<synchronous>, transform_indices = @transform_12, window_bounds = array<i64: 8, 16>}, {pipeline_mode = #tpu.pipeline_mode<synchronous>, transform_indices = @transform_13, window_bounds = array<i64: 1, 16>}, {pipeline_mode = #tpu.pipeline_mode<synchronous>, transform_indices = @transform_14, window_bounds = array<i64: 16, 128>}, {pipeline_mode = #tpu.pipeline_mode<synchronous>, transform_indices = @transform_15, window_bounds = array<i64: 1, 128>}, {transform_indices = @transform_16, window_bounds = array<i64: 16, 128>}]} {
    %c0 = arith.constant 0 : index
    %c0_0 = arith.constant 0 : index
    %0 = vector.load %arg1[%c0, %c0_0] : memref<16x8xf32, #tpu.memory_space<vmem>>, vector<16x8xf32>
    %1 = arith.truncf %0 : vector<16x8xf32> to vector<16x8xbf16>
    %c0_1 = arith.constant 0 : index
    %c0_2 = arith.constant 0 : index
    %2 = vector.load %arg2[%c0_1, %c0_2] : memref<8x256xbf16, #tpu.memory_space<vmem>>, vector<8x256xbf16>
    %cst = arith.constant dense<0.000000e+00> : vector<16x256xf32>
    %3 = tpu.matmul %1, %2, %cst {dimension_numbers = #tpu.dot_dimension_numbers<[1], [0], [0], [1], [0, 0, 1, 1], [], []>} : vector<16x8xbf16>, vector<8x256xbf16>, vector<16x256xf32> -> vector<16x256xf32>
    %c0_3 = arith.constant 0 : index
    %c0_4 = arith.constant 0 : index
    %4 = vector.load %arg3[%c0_3, %c0_4] : memref<1x256xf32, #tpu.memory_space<vmem>>, vector<1x256xf32>
    %5 = vector.broadcast %4 : vector<1x256xf32> to vector<16x256xf32>
    %6 = arith.addf %3, %5 : vector<16x256xf32>
    %cst_5 = arith.constant 0.000000e+00 : f32
    %7 = vector.broadcast %cst_5 : f32 to vector<16x256xf32>
    %8 = arith.maximumf %6, %7 : vector<16x256xf32>
    %9 = arith.truncf %8 : vector<16x256xf32> to vector<16x256xbf16>
    %c0_6 = arith.constant 0 : index
    %c0_7 = arith.constant 0 : index
    %10 = vector.load %arg4[%c0_6, %c0_7] : memref<256x128xbf16, #tpu.memory_space<vmem>>, vector<256x128xbf16>
    %cst_8 = arith.constant dense<0.000000e+00> : vector<16x128xf32>
    %11 = tpu.matmul %9, %10, %cst_8 {dimension_numbers = #tpu.dot_dimension_numbers<[1], [0], [0], [1], [0, 0, 1, 1], [], []>} : vector<16x256xbf16>, vector<256x128xbf16>, vector<16x128xf32> -> vector<16x128xf32>
    %c0_9 = arith.constant 0 : index
    %c0_10 = arith.constant 0 : index
    %12 = vector.load %arg5[%c0_9, %c0_10] : memref<1x128xf32, #tpu.memory_space<vmem>>, vector<1x128xf32>
    %13 = vector.broadcast %12 : vector<1x128xf32> to vector<16x128xf32>
    %14 = arith.addf %11, %13 : vector<16x128xf32>
    %cst_11 = arith.constant 0.000000e+00 : f32
    %15 = vector.broadcast %cst_11 : f32 to vector<16x128xf32>
    %16 = arith.maximumf %14, %15 : vector<16x128xf32>
    %17 = arith.truncf %16 : vector<16x128xf32> to vector<16x128xbf16>
    %c0_12 = arith.constant 0 : index
    %c0_13 = arith.constant 0 : index
    %18 = vector.load %arg6[%c0_12, %c0_13] : memref<128x128xbf16, #tpu.memory_space<vmem>>, vector<128x128xbf16>
    %cst_14 = arith.constant dense<0.000000e+00> : vector<16x128xf32>
    %19 = tpu.matmul %17, %18, %cst_14 {dimension_numbers = #tpu.dot_dimension_numbers<[1], [0], [0], [1], [0, 0, 1, 1], [], []>} : vector<16x128xbf16>, vector<128x128xbf16>, vector<16x128xf32> -> vector<16x128xf32>
    %c0_15 = arith.constant 0 : index
    %c0_16 = arith.constant 0 : index
    %20 = vector.load %arg7[%c0_15, %c0_16] : memref<1x128xf32, #tpu.memory_space<vmem>>, vector<1x128xf32>
    %21 = vector.broadcast %20 : vector<1x128xf32> to vector<16x128xf32>
    %22 = arith.addf %19, %21 : vector<16x128xf32>
    %cst_17 = arith.constant 0.000000e+00 : f32
    %23 = vector.broadcast %cst_17 : f32 to vector<16x128xf32>
    %24 = arith.maximumf %22, %23 : vector<16x128xf32>
    %25 = arith.truncf %24 : vector<16x128xf32> to vector<16x128xbf16>
    %c0_18 = arith.constant 0 : index
    %c0_19 = arith.constant 0 : index
    %26 = vector.load %arg8[%c0_18, %c0_19] : memref<128x64xbf16, #tpu.memory_space<vmem>>, vector<128x64xbf16>
    %cst_20 = arith.constant dense<0.000000e+00> : vector<16x64xf32>
    %27 = tpu.matmul %25, %26, %cst_20 {dimension_numbers = #tpu.dot_dimension_numbers<[1], [0], [0], [1], [0, 0, 1, 1], [], []>} : vector<16x128xbf16>, vector<128x64xbf16>, vector<16x64xf32> -> vector<16x64xf32>
    %c0_21 = arith.constant 0 : index
    %c0_22 = arith.constant 0 : index
    %28 = vector.load %arg9[%c0_21, %c0_22] : memref<1x64xf32, #tpu.memory_space<vmem>>, vector<1x64xf32>
    %29 = vector.broadcast %28 : vector<1x64xf32> to vector<16x64xf32>
    %30 = arith.addf %27, %29 : vector<16x64xf32>
    %cst_23 = arith.constant 0.000000e+00 : f32
    %31 = vector.broadcast %cst_23 : f32 to vector<16x64xf32>
    %32 = arith.maximumf %30, %31 : vector<16x64xf32>
    %33 = arith.truncf %32 : vector<16x64xf32> to vector<16x64xbf16>
    %c0_24 = arith.constant 0 : index
    %c0_25 = arith.constant 0 : index
    %34 = vector.load %arg10[%c0_24, %c0_25] : memref<64x32xbf16, #tpu.memory_space<vmem>>, vector<64x32xbf16>
    %cst_26 = arith.constant dense<0.000000e+00> : vector<16x32xf32>
    %35 = tpu.matmul %33, %34, %cst_26 {dimension_numbers = #tpu.dot_dimension_numbers<[1], [0], [0], [1], [0, 0, 1, 1], [], []>} : vector<16x64xbf16>, vector<64x32xbf16>, vector<16x32xf32> -> vector<16x32xf32>
    %c0_27 = arith.constant 0 : index
    %c0_28 = arith.constant 0 : index
    %36 = vector.load %arg11[%c0_27, %c0_28] : memref<1x32xf32, #tpu.memory_space<vmem>>, vector<1x32xf32>
    %37 = vector.broadcast %36 : vector<1x32xf32> to vector<16x32xf32>
    %38 = arith.addf %35, %37 : vector<16x32xf32>
    %cst_29 = arith.constant 0.000000e+00 : f32
    %39 = vector.broadcast %cst_29 : f32 to vector<16x32xf32>
    %40 = arith.maximumf %38, %39 : vector<16x32xf32>
    %41 = arith.truncf %40 : vector<16x32xf32> to vector<16x32xbf16>
    %c0_30 = arith.constant 0 : index
    %c0_31 = arith.constant 0 : index
    %42 = vector.load %arg12[%c0_30, %c0_31] : memref<32x16xbf16, #tpu.memory_space<vmem>>, vector<32x16xbf16>
    %cst_32 = arith.constant dense<0.000000e+00> : vector<16x16xf32>
    %43 = tpu.matmul %41, %42, %cst_32 {dimension_numbers = #tpu.dot_dimension_numbers<[1], [0], [0], [1], [0, 0, 1, 1], [], []>} : vector<16x32xbf16>, vector<32x16xbf16>, vector<16x16xf32> -> vector<16x16xf32>
    %c0_33 = arith.constant 0 : index
    %c0_34 = arith.constant 0 : index
    %44 = vector.load %arg13[%c0_33, %c0_34] : memref<8x16xbf16, #tpu.memory_space<vmem>>, vector<8x16xbf16>
    %cst_35 = arith.constant dense<0.000000e+00> : vector<16x16xf32>
    %45 = tpu.matmul %1, %44, %cst_35 {dimension_numbers = #tpu.dot_dimension_numbers<[1], [0], [0], [1], [0, 0, 1, 1], [], []>} : vector<16x8xbf16>, vector<8x16xbf16>, vector<16x16xf32> -> vector<16x16xf32>
    %46 = arith.addf %43, %45 : vector<16x16xf32>
    %c0_36 = arith.constant 0 : index
    %c0_37 = arith.constant 0 : index
    %47 = vector.load %arg14[%c0_36, %c0_37] : memref<1x16xf32, #tpu.memory_space<vmem>>, vector<1x16xf32>
    %48 = vector.broadcast %47 : vector<1x16xf32> to vector<16x16xf32>
    %49 = arith.addf %46, %48 : vector<16x16xf32>
    %cst_38 = arith.constant 0.000000e+00 : f32
    %50 = vector.broadcast %cst_38 : f32 to vector<16x16xf32>
    %51 = arith.maximumf %49, %50 : vector<16x16xf32>
    %52 = arith.truncf %51 : vector<16x16xf32> to vector<16x16xbf16>
    %c0_39 = arith.constant 0 : index
    %c0_40 = arith.constant 0 : index
    %53 = vector.load %arg15[%c0_39, %c0_40] : memref<16x128xbf16, #tpu.memory_space<vmem>>, vector<16x128xbf16>
    %cst_41 = arith.constant dense<0.000000e+00> : vector<16x128xf32>
    %54 = tpu.matmul %52, %53, %cst_41 {dimension_numbers = #tpu.dot_dimension_numbers<[1], [0], [0], [1], [0, 0, 1, 1], [], []>} : vector<16x16xbf16>, vector<16x128xbf16>, vector<16x128xf32> -> vector<16x128xf32>
    %c0_42 = arith.constant 0 : index
    %c0_43 = arith.constant 0 : index
    %55 = vector.load %arg16[%c0_42, %c0_43] : memref<1x128xf32, #tpu.memory_space<vmem>>, vector<1x128xf32>
    %56 = vector.broadcast %55 : vector<1x128xf32> to vector<16x128xf32>
    %57 = arith.addf %54, %56 : vector<16x128xf32>
    %c0_44 = arith.constant 0 : index
    %c0_45 = arith.constant 0 : index
    %58 = vector.load %arg17[%c0_44, %c0_45] : memref<16x128xf32, #tpu.memory_space<vmem>>, vector<16x128xf32>
    tpu.vector_store %arg17[%c0_44, %c0_45], %57 {strides = array<i32>} : memref<16x128xf32, #tpu.memory_space<vmem>>, vector<16x128xf32>,
    return
  }
  func.func @transform_0(%arg0: i32) -> (i32, i32) {
    %c0_i32 = arith.constant 0 : i32
    %c0_i32_0 = arith.constant 0 : i32
    return %arg0, %c0_i32 : i32, i32
  }
  func.func @transform_1(%arg0: i32) -> (i32, i32) {
    %c0_i32 = arith.constant 0 : i32
    %c0_i32_0 = arith.constant 0 : i32
    %c0_i32_1 = arith.constant 0 : i32
    return %c0_i32, %c0_i32_0 : i32, i32
  }
  func.func @transform_2(%arg0: i32) -> (i32, i32) {
    %c0_i32 = arith.constant 0 : i32
    %c0_i32_0 = arith.constant 0 : i32
    %c0_i32_1 = arith.constant 0 : i32
    return %c0_i32, %c0_i32_0 : i32, i32
  }
  func.func @transform_3(%arg0: i32) -> (i32, i32) {
    %c0_i32 = arith.constant 0 : i32
    %c0_i32_0 = arith.constant 0 : i32
    %c0_i32_1 = arith.constant 0 : i32
    return %c0_i32, %c0_i32_0 : i32, i32
  }
  func.func @transform_4(%arg0: i32) -> (i32, i32) {
    %c0_i32 = arith.constant 0 : i32
    %c0_i32_0 = arith.constant 0 : i32
    %c0_i32_1 = arith.constant 0 : i32
    return %c0_i32, %c0_i32_0 : i32, i32
  }
  func.func @transform_5(%arg0: i32) -> (i32, i32) {
    %c0_i32 = arith.constant 0 : i32
    %c0_i32_0 = arith.constant 0 : i32
    %c0_i32_1 = arith.constant 0 : i32
    return %c0_i32, %c0_i32_0 : i32, i32
  }
  func.func @transform_6(%arg0: i32) -> (i32, i32) {
    %c0_i32 = arith.constant 0 : i32
    %c0_i32_0 = arith.constant 0 : i32
    %c0_i32_1 = arith.constant 0 : i32
    return %c0_i32, %c0_i32_0 : i32, i32
  }
  func.func @transform_7(%arg0: i32) -> (i32, i32) {
    %c0_i32 = arith.constant 0 : i32
    %c0_i32_0 = arith.constant 0 : i32
    %c0_i32_1 = arith.constant 0 : i32
    return %c0_i32, %c0_i32_0 : i32, i32
  }
  func.func @transform_8(%arg0: i32) -> (i32, i32) {
    %c0_i32 = arith.constant 0 : i32
    %c0_i32_0 = arith.constant 0 : i32
    %c0_i32_1 = arith.constant 0 : i32
    return %c0_i32, %c0_i32_0 : i32, i32
  }
  func.func @transform_9(%arg0: i32) -> (i32, i32) {
    %c0_i32 = arith.constant 0 : i32
    %c0_i32_0 = arith.constant 0 : i32
    %c0_i32_1 = arith.constant 0 : i32
    return %c0_i32, %c0_i32_0 : i32, i32
  }
  func.func @transform_10(%arg0: i32) -> (i32, i32) {
    %c0_i32 = arith.constant 0 : i32
    %c0_i32_0 = arith.constant 0 : i32
    %c0_i32_1 = arith.constant 0 : i32
    return %c0_i32, %c0_i32_0 : i32, i32
  }
  func.func @transform_11(%arg0: i32) -> (i32, i32) {
    %c0_i32 = arith.constant 0 : i32
    %c0_i32_0 = arith.constant 0 : i32
    %c0_i32_1 = arith.constant 0 : i32
    return %c0_i32, %c0_i32_0 : i32, i32
  }
  func.func @transform_12(%arg0: i32) -> (i32, i32) {
    %c0_i32 = arith.constant 0 : i32
    %c0_i32_0 = arith.constant 0 : i32
    %c0_i32_1 = arith.constant 0 : i32
    return %c0_i32, %c0_i32_0 : i32, i32
  }
  func.func @transform_13(%arg0: i32) -> (i32, i32) {
    %c0_i32 = arith.constant 0 : i32
    %c0_i32_0 = arith.constant 0 : i32
    %c0_i32_1 = arith.constant 0 : i32
    return %c0_i32, %c0_i32_0 : i32, i32
  }
  func.func @transform_14(%arg0: i32) -> (i32, i32) {
    %c0_i32 = arith.constant 0 : i32
    %c0_i32_0 = arith.constant 0 : i32
    %c0_i32_1 = arith.constant 0 : i32
    return %c0_i32, %c0_i32_0 : i32, i32
  }
  func.func @transform_15(%arg0: i32) -> (i32, i32) {
    %c0_i32 = arith.constant 0 : i32
    %c0_i32_0 = arith.constant 0 : i32
    %c0_i32_1 = arith.constant 0 : i32
    return %c0_i32, %c0_i32_0 : i32, i32
  }
  func.func @transform_16(%arg0: i32) -> (i32, i32) {
    %c0_i32 = arith.constant 0 : i32
    %c0_i32_0 = arith.constant 0 : i32
    return %arg0, %c0_i32 : i32, i32
  }
}

</mosaic_0001>

<llo_original>
// kernel: cnn_regressor_forward.1
$region0: #{cnn_regressor_forward.1}
  #allocation0 [shape = 'u32[]', space=smem, size = 0x4, offset = 0x4, fixed_abs, tag = 'smem constant byte address 0x4 - core index']
  #allocation1 [shape = 'u32[72,128]{1,0:T(1,128)}', space=vmem, size = 0x9000, scoped, tag = 'internal scratch']
  %s0 = inlined_call_operand.vmem [shape: f32[16,8], index: 0, kind: input, shape index: {}]
  %s1 = inlined_call_operand.vmem [shape: bf16[8,256], index: 1, kind: input, shape index: {}]
  %s2 = inlined_call_operand.vmem [shape: f32[1,256], index: 2, kind: input, shape index: {}]
  %s3 = inlined_call_operand.vmem [shape: bf16[256,128], index: 3, kind: input, shape index: {}]
  %s4 = inlined_call_operand.vmem [shape: f32[1,128], index: 4, kind: input, shape index: {}]
  %s5 = inlined_call_operand.hbm [shape: bf16[128,128], index: 5, kind: input, shape index: {}]
  %s6 = inlined_call_operand.vmem [shape: f32[1,128], index: 6, kind: input, shape index: {}]
  %s7 = inlined_call_operand.vmem [shape: bf16[128,64], index: 7, kind: input, shape index: {}]
  %s8 = inlined_call_operand.vmem [shape: f32[1,64], index: 8, kind: input, shape index: {}]
  %s9 = inlined_call_operand.vmem [shape: bf16[64,32], index: 9, kind: input, shape index: {}]
  %s10 = inlined_call_operand.vmem [shape: f32[1,32], index: 10, kind: input, shape index: {}]
  %s11 = inlined_call_operand.vmem [shape: bf16[32,16], index: 11, kind: input, shape index: {}]
  %s12 = inlined_call_operand.vmem [shape: bf16[8,16], index: 12, kind: input, shape index: {}]
  %s13 = inlined_call_operand.vmem [shape: f32[1,16], index: 13, kind: input, shape index: {}]
  %s14 = inlined_call_operand.vmem [shape: bf16[16,128], index: 14, kind: input, shape index: {}]
  %s15 = inlined_call_operand.vmem [shape: f32[1,128], index: 15, kind: input, shape index: {}]
  %s16 = inlined_call_operand.vmem [shape: f32[16,128], index: 16, kind: output, shape index: {}]
  %s17 = sld [smem:[#allocation0]]
  $region78: #{cnn_regressor_forward.1} parent=0
    _
  %s19 = ssub.s32 1, %s17
  %s20 = scalar_select 0, %s19, %s17
  $region1: #{cnn_regressor_forward.1} parent=0
    #allocation2 [shape = 'u8[32768]{0}', space=vmem, size = 0x8000, scoped, tag = 'input window, operand 5, single buffered']
    #allocation3 [shape = 's32[1]{0}', space=sflag, size = 0x4, scoped, tag = 'scoped memory for cnn_regressor_forward.1']
    %21 = vsyncpa [#allocation3], 0
    // Predicated region
    $region2: #{cnn_regressor_forward.1} parent=1 // pred_check
      _
    $region3: #{cnn_regressor_forward.1} parent=1 // pred_check_branch
      %23 = sbr.rel (0) target = $region5
    $region4: #{cnn_regressor_forward.1} parent=1 // pred_region
      _
    $region5: #{cnn_regressor_forward.1} parent=1 // pred_fallthru
      _
    // Predicated region
    $region6: #{cnn_regressor_forward.1} parent=1 // pred_check
      _
    $region7: #{cnn_regressor_forward.1} parent=1 // pred_check_branch
      %25 = sbr.rel (0) target = $region9
    $region8: #{cnn_regressor_forward.1} parent=1 // pred_region
      _
    $region9: #{cnn_regressor_forward.1} parent=1 // pred_fallthru
      _
    // Predicated region
    $region10: #{cnn_regressor_forward.1} parent=1 // pred_check
      _
    $region11: #{cnn_regressor_forward.1} parent=1 // pred_check_branch
      %27 = sbr.rel (0) target = $region13
    $region12: #{cnn_regressor_forward.1} parent=1 // pred_region
      _
    $region13: #{cnn_regressor_forward.1} parent=1 // pred_fallthru
      _
    // Predicated region
    $region14: #{cnn_regressor_forward.1} parent=1 // pred_check
      _
    $region15: #{cnn_regressor_forward.1} parent=1 // pred_check_branch
      %29 = sbr.rel (0) target = $region17
    $region16: #{cnn_regressor_forward.1} parent=1 // pred_region
      _
    $region17: #{cnn_regressor_forward.1} parent=1 // pred_fallthru
      _
    // Predicated region
    $region18: #{cnn_regressor_forward.1} parent=1 // pred_check
      _
    $region19: #{cnn_regressor_forward.1} parent=1 // pred_check_branch
      %31 = sbr.rel (0) target = $region21
    $region20: #{cnn_regressor_forward.1} parent=1 // pred_region
      _
    $region21: #{cnn_regressor_forward.1} parent=1 // pred_fallthru
      _
    // Predicated region
    $region22: #{cnn_regressor_forward.1} parent=1 // pred_check
      _
    $region23: #{cnn_regressor_forward.1} parent=1 // pred_check_branch
      %33 = sbr.rel (0) target = $region25
    $region24: #{cnn_regressor_forward.1} parent=1 // pred_region
      %35 = vsyncadd [#allocation3], 0
      %s36 = sshll.u32 %s5, 4
      %s37 = int_to_ptr.hbm [resolvable:$true] %s36
      %s38 = sshll.u32 [#allocation2], 4
      %s39 = int_to_ptr.vmem [resolvable:$true] %s38
      %44 = dma.hbm_to_vmem [thread:$0]  %s37, 1024, %s39, [#allocation3], 64, 64, 4
    $region25: #{cnn_regressor_forward.1} parent=1 // pred_fallthru
      _
    // Predicated region
    $region26: #{cnn_regressor_forward.1} parent=1 // pred_check
      _
    $region27: #{cnn_regressor_forward.1} parent=1 // pred_check_branch
      %46 = sbr.rel (0) target = $region29
    $region28: #{cnn_regressor_forward.1} parent=1 // pred_region
      _
    $region29: #{cnn_regressor_forward.1} parent=1 // pred_fallthru
      _
    // Predicated region
    $region30: #{cnn_regressor_forward.1} parent=1 // pred_check
      _
    $region31: #{cnn_regressor_forward.1} parent=1 // pred_check_branch
      %48 = sbr.rel (0) target = $region33
    $region32: #{cnn_regressor_forward.1} parent=1 // pred_region
      _
    $region33: #{cnn_regressor_forward.1} parent=1 // pred_fallthru
      _
    // Predicated region
    $region34: #{cnn_regressor_forward.1} parent=1 // pred_check
      _
    $region35: #{cnn_regressor_forward.1} parent=1 // pred_check_branch
      %50 = sbr.rel (0) target = $region37
    $region36: #{cnn_regressor_forward.1} parent=1 // pred_region
      _
    $region37: #{cnn_regressor_forward.1} parent=1 // pred_fallthru
      _
    // Predicated region
    $region38: #{cnn_regressor_forward.1} parent=1 // pred_check
      _
    $region39: #{cnn_regressor_forward.1} parent=1 // pred_check_branch
      %52 = sbr.rel (0) target = $region41
    $region40: #{cnn_regressor_forward.1} parent=1 // pred_region
      _
    $region41: #{cnn_regressor_forward.1} parent=1 // pred_fallthru
      _
    // Predicated region
    $region42: #{cnn_regressor_forward.1} parent=1 // pred_check
      _
    $region43: #{cnn_regressor_forward.1} parent=1 // pred_check_branch
      %54 = sbr.rel (0) target = $region45
    $region44: #{cnn_regressor_forward.1} parent=1 // pred_region
      _
    $region45: #{cnn_regressor_forward.1} parent=1 // pred_fallthru
      _
    // Predicated region
    $region46: #{cnn_regressor_forward.1} parent=1 // pred_check
      _
    $region47: #{cnn_regressor_forward.1} parent=1 // pred_check_branch
      %56 = sbr.rel (0) target = $region49
    $region48: #{cnn_regressor_forward.1} parent=1 // pred_region
      _
    $region49: #{cnn_regressor_forward.1} parent=1 // pred_fallthru
      _
    // Predicated region
    $region50: #{cnn_regressor_forward.1} parent=1 // pred_check
      _
    $region51: #{cnn_regressor_forward.1} parent=1 // pred_check_branch
      %58 = sbr.rel (0) target = $region53
    $region52: #{cnn_regressor_forward.1} parent=1 // pred_region
      _
    $region53: #{cnn_regressor_forward.1} parent=1 // pred_fallthru
      _
    // Predicated region
    $region54: #{cnn_regressor_forward.1} parent=1 // pred_check
      _
    $region55: #{cnn_regressor_forward.1} parent=1 // pred_check_branch
      %60 = sbr.rel (0) target = $region57
    $region56: #{cnn_regressor_forward.1} parent=1 // pred_region
      _
    $region57: #{cnn_regressor_forward.1} parent=1 // pred_fallthru
      _
    // Predicated region
    $region58: #{cnn_regressor_forward.1} parent=1 // pred_check
      _
    $region59: #{cnn_regressor_forward.1} parent=1 // pred_check_branch
      %62 = sbr.rel (0) target = $region61
    $region60: #{cnn_regressor_forward.1} parent=1 // pred_region
      _
    $region61: #{cnn_regressor_forward.1} parent=1 // pred_fallthru
      _
    // Predicated region
    $region62: #{cnn_regressor_forward.1} parent=1 // pred_check
      _
    $region63: #{cnn_regressor_forward.1} parent=1 // pred_check_branch
      %64 = sbr.rel (0) target = $region65
    $region64: #{cnn_regressor_forward.1} parent=1 // pred_region
      _
    $region65: #{cnn_regressor_forward.1} parent=1 // pred_fallthru
      _
    // Predicated region
    $region66: #{cnn_regressor_forward.1} parent=1 // pred_check
      _
    $region67: #{cnn_regressor_forward.1} parent=1 // pred_check_branch
      %66 = sbr.rel (0) target = $region69
    $region68: #{cnn_regressor_forward.1} parent=1 // pred_region
      %68 = dma.done [#allocation3], 1024
    $region69: #{cnn_regressor_forward.1} parent=1 // pred_fallthru
      _
    %v70 = vld [vmem:[%s0] sm:$0xff]
    %v71 = vld [vmem:[%s0 + $0x8] sm:$0xff]
    %v72 = vpack.c.bf16 %v71, %v70
    %v73 = vld [vmem:[%s1] sm:$0xff]
    %v74 = vld [vmem:[%s2] sm:$0x3]
    %v76 = vperm.slane %v74, 0
    %v77 = vperm.slane %v74, 1
    %v81 = vunpack.c.l.b16 %v73
    %v82 = vunpack.c.h.b16 %v73
    %v83 = vpack.c.b16 %v81, %v81
    %v84 = vpack.c.b16 %v82, %v82
    %vm85 = vcmask 64512
    %v87 = vsel %vm85, %v72, 0
    %vm89 = vcmask 1043456
    %v91 = vsel %vm89, %v83, 0
    %v94 = vsel %vm89, %v84, 0
    %96 = vmatpush.bf16.msra.mxu0 0
    %97 = vmatpush.bf16.msra.mxu0 0
    %98 = vmatpush.bf16.msra.mxu0 0
    %99 = vmatpush.bf16.msra.mxu0 0
    %100 = vmatpush.bf16.msra.mxu0 0
    %101 = vmatpush.bf16.msra.mxu0 0
    %102 = vmatpush.bf16.msra.mxu0 0
    %103 = vmatpush.bf16.msra.mxu0 %v91
    %104 = vmatmul.bf16.gmra.mxu0 %v87
    %v105 = vpop.f32.mrf.mxu0
    %v106 = vadd.f32 %v76, %v105
    %v107 = vpop.f32.mrf.mxu0
    %v108 = vadd.f32 %v76, %v107
    %109 = vdwg.mxu0
    %110 = vmatpush.bf16.msra.mxu0 0
    %111 = vmatpush.bf16.msra.mxu0 0
    %112 = vmatpush.bf16.msra.mxu0 0
    %113 = vmatpush.bf16.msra.mxu0 0
    %114 = vmatpush.bf16.msra.mxu0 0
    %115 = vmatpush.bf16.msra.mxu0 0
    %116 = vmatpush.bf16.msra.mxu0 0
    %117 = vmatpush.bf16.msra.mxu0 %v94
    %118 = vmatmul.bf16.gmra.mxu0 %v87
    %v119 = vpop.f32.mrf.mxu0
    %v120 = vadd.f32 %v77, %v119
    %v121 = vpop.f32.mrf.mxu0
    %v122 = vadd.f32 %v77, %v121
    %123 = vdwg.mxu0
    %v124 = vmax.f32 %v106, 0.0
    %v125 = vmax.f32 %v120, 0.0
    %v126 = vmax.f32 %v108, 0.0
    %v127 = vmax.f32 %v122, 0.0
    %v128 = vpack.c.bf16 %v126, %v124
    %v129 = vpack.c.bf16 %v127, %v125
    %v130 = vld [vmem:[%s3] sm:$0xf]
    %v131 = vld [vmem:[%s3 + $0x4] sm:$0xf]
    %v132 = vld [vmem:[%s3 + $0x8] sm:$0xf]
    %v133 = vld [vmem:[%s3 + $0xc] sm:$0xf]
    %v134 = vld [vmem:[%s3 + $0x10] sm:$0xf]
    %v135 = vld [vmem:[%s3 + $0x14] sm:$0xf]
    %v136 = vld [vmem:[%s3 + $0x18] sm:$0xf]
    %v137 = vld [vmem:[%s3 + $0x1c] sm:$0xf]
    %v138 = vld [vmem:[%s3 + $0x20] sm:$0xf]
    %v139 = vld [vmem:[%s3 + $0x24] sm:$0xf]
    %v140 = vld [vmem:[%s3 + $0x28] sm:$0xf]
    %v141 = vld [vmem:[%s3 + $0x2c] sm:$0xf]
    %v142 = vld [vmem:[%s3 + $0x30] sm:$0xf]
    %v143 = vld [vmem:[%s3 + $0x34] sm:$0xf]
    %v144 = vld [vmem:[%s3 + $0x38] sm:$0xf]
    %v145 = vld [vmem:[%s3 + $0x3c] sm:$0xf]
    %v146 = vld [vmem:[%s3 + $0x40] sm:$0xf]
    %v147 = vld [vmem:[%s3 + $0x44] sm:$0xf]
    %v148 = vld [vmem:[%s3 + $0x48] sm:$0xf]
    %v149 = vld [vmem:[%s3 + $0x4c] sm:$0xf]
    %v150 = vld [vmem:[%s3 + $0x50] sm:$0xf]
    %v151 = vld [vmem:[%s3 + $0x54] sm:$0xf]
    %v152 = vld [vmem:[%s3 + $0x58] sm:$0xf]
    %v153 = vld [vmem:[%s3 + $0x5c] sm:$0xf]
    %v154 = vld [vmem:[%s3 + $0x60] sm:$0xf]
    %v155 = vld [vmem:[%s3 + $0x64] sm:$0xf]
    %v156 = vld [vmem:[%s3 + $0x68] sm:$0xf]
    %v157 = vld [vmem:[%s3 + $0x6c] sm:$0xf]
    %v158 = vld [vmem:[%s3 + $0x70] sm:$0xf]
    %v159 = vld [vmem:[%s3 + $0x74] sm:$0xf]
    %v160 = vld [vmem:[%s3 + $0x78] sm:$0xf]
    %v161 = vld [vmem:[%s3 + $0x7c] sm:$0xf]
    %v162 = vld [vmem:[%s4] sm:$0x1]
    %v164 = vperm.slane %v162, 0
    %v198 = vunpack.c.l.b16 %v130
    %v199 = vunpack.c.l.b16 %v131
    %v200 = vunpack.c.l.b16 %v132
    %v201 = vunpack.c.l.b16 %v133
    %v202 = vunpack.c.l.b16 %v134
    %v203 = vunpack.c.l.b16 %v135
    %v204 = vunpack.c.l.b16 %v136
    %v205 = vunpack.c.l.b16 %v137
    %v206 = vunpack.c.l.b16 %v138
    %v207 = vunpack.c.l.b16 %v139
    %v208 = vunpack.c.l.b16 %v140
    %v209 = vunpack.c.l.b16 %v141
    %v210 = vunpack.c.l.b16 %v142
    %v211 = vunpack.c.l.b16 %v143
    %v212 = vunpack.c.l.b16 %v144
    %v213 = vunpack.c.l.b16 %v145
    %v214 = vunpack.c.l.b16 %v146
    %v215 = vunpack.c.l.b16 %v147
    %v216 = vunpack.c.l.b16 %v148
    %v217 = vunpack.c.l.b16 %v149
    %v218 = vunpack.c.l.b16 %v150
    %v219 = vunpack.c.l.b16 %v151
    %v220 = vunpack.c.l.b16 %v152
    %v221 = vunpack.c.l.b16 %v153
    %v222 = vunpack.c.l.b16 %v154
    %v223 = vunpack.c.l.b16 %v155
    %v224 = vunpack.c.l.b16 %v156
    %v225 = vunpack.c.l.b16 %v157
    %v226 = vunpack.c.l.b16 %v158
    %v227 = vunpack.c.l.b16 %v159
    %v228 = vunpack.c.l.b16 %v160
    %v229 = vunpack.c.l.b16 %v161
    %v230 = vpack.c.b16 %v199, %v198
    %v231 = vpack.c.b16 %v201, %v200
    %v232 = vpack.c.b16 %v203, %v202
    %v233 = vpack.c.b16 %v205, %v204
    %v234 = vpack.c.b16 %v207, %v206
    %v235 = vpack.c.b16 %v209, %v208
    %v236 = vpack.c.b16 %v211, %v210
    %v237 = vpack.c.b16 %v213, %v212
    %v238 = vpack.c.b16 %v215, %v214
    %v239 = vpack.c.b16 %v217, %v216
    %v240 = vpack.c.b16 %v219, %v218
    %v241 = vpack.c.b16 %v221, %v220
    %v242 = vpack.c.b16 %v223, %v222
    %v243 = vpack.c.b16 %v225, %v224
    %v244 = vpack.c.b16 %v227, %v226
    %v245 = vpack.c.b16 %v229, %v228
    %262 = vmatpush.bf16.msra.mxu0 %v237
    %263 = vmatpush.bf16.msra.mxu0 %v236
    %264 = vmatpush.bf16.msra.mxu0 %v235
    %265 = vmatpush.bf16.msra.mxu0 %v234
    %266 = vmatpush.bf16.msra.mxu0 %v233
    %267 = vmatpush.bf16.msra.mxu0 %v232
    %268 = vmatpush.bf16.msra.mxu0 %v231
    %269 = vmatpush.bf16.msra.mxu0 %v230
    %270 = vmatmul.bf16.gmra.mxu0 %v128
    %v271 = vpop.f32.mrf.mxu0
    %v272 = vadd.f32 %v164, %v271
    %v273 = vpop.f32.mrf.mxu0
    %v274 = vadd.f32 %v164, %v273
    %275 = vdwg.mxu0
    %276 = vmatpush.bf16.msra.mxu0 %v245
    %277 = vmatpush.bf16.msra.mxu0 %v244
    %278 = vmatpush.bf16.msra.mxu0 %v243
    %279 = vmatpush.bf16.msra.mxu0 %v242
    %280 = vmatpush.bf16.msra.mxu0 %v241
    %281 = vmatpush.bf16.msra.mxu0 %v240
    %282 = vmatpush.bf16.msra.mxu0 %v239
    %283 = vmatpush.bf16.msra.mxu0 %v238
    %284 = vmatmul.bf16.gmra.mxu0 %v129
    %v285 = vpop.f32.mrf.mxu0
    %v286 = vadd.f32 %v272, %v285
    %v287 = vpop.f32.mrf.mxu0
    %v288 = vadd.f32 %v274, %v287
    %289 = vdwg.mxu0
    %v290 = vmax.f32 %v286, 0.0
    %v291 = vmax.f32 %v288, 0.0
    %v292 = vpack.c.bf16 %v291, %v290
    %v293 = vld [vmem:[#allocation2] sm:$0xf]
    %v294 = vld [vmem:[#allocation2 + $0x4] sm:$0xf]
    %v295 = vld [vmem:[#allocation2 + $0x8] sm:$0xf]
    %v296 = vld [vmem:[#allocation2 + $0xc] sm:$0xf]
    %v297 = vld [vmem:[#allocation2 + $0x10] sm:$0xf]
    %v298 = vld [vmem:[#allocation2 + $0x14] sm:$0xf]
    %v299 = vld [vmem:[#allocation2 + $0x18] sm:$0xf]
    %v300 = vld [vmem:[#allocation2 + $0x1c] sm:$0xf]
    %v301 = vld [vmem:[#allocation2 + $0x20] sm:$0xf]
    %v302 = vld [vmem:[#allocation2 + $0x24] sm:$0xf]
    %v303 = vld [vmem:[#allocation2 + $0x28] sm:$0xf]
    %v304 = vld [vmem:[#allocation2 + $0x2c] sm:$0xf]
    %v305 = vld [vmem:[#allocation2 + $0x30] sm:$0xf]
    %v306 = vld [vmem:[#allocation2 + $0x34] sm:$0xf]
    %v307 = vld [vmem:[#allocation2 + $0x38] sm:$0xf]
    %v308 = vld [vmem:[#allocation2 + $0x3c] sm:$0xf]
    %v309 = vld [vmem:[%s6] sm:$0x1]
    %v311 = vperm.slane %v309, 0
    %v329 = vunpack.c.l.b16 %v293
    %v330 = vunpack.c.l.b16 %v294
    %v331 = vunpack.c.l.b16 %v295
    %v332 = vunpack.c.l.b16 %v296
    %v333 = vunpack.c.l.b16 %v297
    %v334 = vunpack.c.l.b16 %v298
    %v335 = vunpack.c.l.b16 %v299
    %v336 = vunpack.c.l.b16 %v300
    %v337 = vunpack.c.l.b16 %v301
    %v338 = vunpack.c.l.b16 %v302
    %v339 = vunpack.c.l.b16 %v303
    %v340 = vunpack.c.l.b16 %v304
    %v341 = vunpack.c.l.b16 %v305
    %v342 = vunpack.c.l.b16 %v306
    %v343 = vunpack.c.l.b16 %v307
    %v344 = vunpack.c.l.b16 %v308
    %v345 = vpack.c.b16 %v330, %v329
    %v346 = vpack.c.b16 %v332, %v331
    %v347 = vpack.c.b16 %v334, %v333
    %v348 = vpack.c.b16 %v336, %v335
    %v349 = vpack.c.b16 %v338, %v337
    %v350 = vpack.c.b16 %v340, %v339
    %v351 = vpack.c.b16 %v342, %v341
    %v352 = vpack.c.b16 %v344, %v343
    %361 = vmatpush.bf16.msra.mxu0 %v352
    %362 = vmatpush.bf16.msra.mxu0 %v351
    %363 = vmatpush.bf16.msra.mxu0 %v350
    %364 = vmatpush.bf16.msra.mxu0 %v349
    %365 = vmatpush.bf16.msra.mxu0 %v348
    %366 = vmatpush.bf16.msra.mxu0 %v347
    %367 = vmatpush.bf16.msra.mxu0 %v346
    %368 = vmatpush.bf16.msra.mxu0 %v345
    %369 = vmatmul.bf16.gmra.mxu0 %v292
    %v370 = vpop.f32.mrf.mxu0
    %v371 = vadd.f32 %v311, %v370
    %v372 = vpop.f32.mrf.mxu0
    %v373 = vadd.f32 %v311, %v372
    %374 = vdwg.mxu0
    %v375 = vmax.f32 %v371, 0.0
    %v376 = vmax.f32 %v373, 0.0
    %v377 = vpack.c.bf16 %v376, %v375
    %v378 = vld [vmem:[%s7] sm:$0xf]
    %v379 = vld [vmem:[%s7 + $0x4] sm:$0xf]
    %v380 = vld [vmem:[%s7 + $0x8] sm:$0xf]
    %v381 = vld [vmem:[%s7 + $0xc] sm:$0xf]
    %v382 = vld [vmem:[%s7 + $0x10] sm:$0xf]
    %v383 = vld [vmem:[%s7 + $0x14] sm:$0xf]
    %v384 = vld [vmem:[%s7 + $0x18] sm:$0xf]
    %v385 = vld [vmem:[%s7 + $0x1c] sm:$0xf]
    %v386 = vld [vmem:[%s7 + $0x20] sm:$0xf]
    %v387 = vld [vmem:[%s7 + $0x24] sm:$0xf]
    %v388 = vld [vmem:[%s7 + $0x28] sm:$0xf]
    %v389 = vld [vmem:[%s7 + $0x2c] sm:$0xf]
    %v390 = vld [vmem:[%s7 + $0x30] sm:$0xf]
    %v391 = vld [vmem:[%s7 + $0x34] sm:$0xf]
    %v392 = vld [vmem:[%s7 + $0x38] sm:$0xf]
    %v393 = vld [vmem:[%s7 + $0x3c] sm:$0xf]
    %v394 = vld [vmem:[%s8] sm:$0x1]
    %v396 = vperm.slane %v394, 0
    %v414 = vunpack.c.l.b16 %v378
    %v415 = vunpack.c.l.b16 %v379
    %v416 = vunpack.c.l.b16 %v380
    %v417 = vunpack.c.l.b16 %v381
    %v418 = vunpack.c.l.b16 %v382
    %v419 = vunpack.c.l.b16 %v383
    %v420 = vunpack.c.l.b16 %v384
    %v421 = vunpack.c.l.b16 %v385
    %v422 = vunpack.c.l.b16 %v386
    %v423 = vunpack.c.l.b16 %v387
    %v424 = vunpack.c.l.b16 %v388
    %v425 = vunpack.c.l.b16 %v389
    %v426 = vunpack.c.l.b16 %v390
    %v427 = vunpack.c.l.b16 %v391
    %v428 = vunpack.c.l.b16 %v392
    %v429 = vunpack.c.l.b16 %v393
    %v430 = vpack.c.b16 %v415, %v414
    %v431 = vpack.c.b16 %v417, %v416
    %v432 = vpack.c.b16 %v419, %v418
    %v433 = vpack.c.b16 %v421, %v420
    %v434 = vpack.c.b16 %v423, %v422
    %v435 = vpack.c.b16 %v425, %v424
    %v436 = vpack.c.b16 %v427, %v426
    %v437 = vpack.c.b16 %v429, %v428
    %446 = vmatpush.bf16.msra.mxu0 %v437
    %447 = vmatpush.bf16.msra.mxu0 %v436
    %448 = vmatpush.bf16.msra.mxu0 %v435
    %449 = vmatpush.bf16.msra.mxu0 %v434
    %450 = vmatpush.bf16.msra.mxu0 %v433
    %451 = vmatpush.bf16.msra.mxu0 %v432
    %452 = vmatpush.bf16.msra.mxu0 %v431
    %453 = vmatpush.bf16.msra.mxu0 %v430
    %454 = vmatmul.bf16.gmra.mxu0 %v377
    %v455 = vpop.f32.mrf.mxu0
    %v456 = vadd.f32 %v396, %v455
    %v457 = vpop.f32.mrf.mxu0
    %v458 = vadd.f32 %v396, %v457
    %459 = vdwg.mxu0
    %v460 = vmax.f32 %v456, 0.0
    %v461 = vmax.f32 %v458, 0.0
    %v462 = vpack.c.bf16 %v461, %v460
    %v463 = vld [vmem:[%s9] sm:$0xf]
    %v464 = vld [vmem:[%s9 + $0x4] sm:$0xf]
    %v465 = vld [vmem:[%s9 + $0x8] sm:$0xf]
    %v466 = vld [vmem:[%s9 + $0xc] sm:$0xf]
    %v467 = vld [vmem:[%s9 + $0x10] sm:$0xf]
    %v468 = vld [vmem:[%s9 + $0x14] sm:$0xf]
    %v469 = vld [vmem:[%s9 + $0x18] sm:$0xf]
    %v470 = vld [vmem:[%s9 + $0x1c] sm:$0xf]
    %v471 = vld [vmem:[%s10] sm:$0x1]
    %v473 = vperm.slane %v471, 0
    %v483 = vunpack.c.l.b16 %v463
    %v484 = vunpack.c.l.b16 %v464
    %v485 = vunpack.c.l.b16 %v465
    %v486 = vunpack.c.l.b16 %v466
    %v487 = vunpack.c.l.b16 %v467
    %v488 = vunpack.c.l.b16 %v468
    %v489 = vunpack.c.l.b16 %v469
    %v490 = vunpack.c.l.b16 %v470
    %v491 = vpack.c.b16 %v484, %v483
    %v492 = vpack.c.b16 %v486, %v485
    %v493 = vpack.c.b16 %v488, %v487
    %v494 = vpack.c.b16 %v490, %v489
    %vm499 = vcmask 523264
    %v501 = vsel %vm499, %v462, 0
    %503 = vmatpush.bf16.msra.mxu0 0
    %504 = vmatpush.bf16.msra.mxu0 0
    %505 = vmatpush.bf16.msra.mxu0 0
    %506 = vmatpush.bf16.msra.mxu0 0
    %507 = vmatpush.bf16.msra.mxu0 %v494
    %508 = vmatpush.bf16.msra.mxu0 %v493
    %509 = vmatpush.bf16.msra.mxu0 %v492
    %510 = vmatpush.bf16.msra.mxu0 %v491
    %511 = vmatmul.bf16.gmra.mxu0 %v501
    %v512 = vpop.f32.mrf.mxu0
    %v513 = vadd.f32 %v473, %v512
    %v514 = vpop.f32.mrf.mxu0
    %v515 = vadd.f32 %v473, %v514
    %516 = vdwg.mxu0
    %v517 = vmax.f32 %v513, 0.0
    %v518 = vmax.f32 %v515, 0.0
    %v519 = vpack.c.bf16 %v518, %v517
    %v520 = vld [vmem:[%s11] sm:$0xf]
    %v521 = vld [vmem:[%s11 + $0x4] sm:$0xf]
    %v522 = vld [vmem:[%s11 + $0x8] sm:$0xf]
    %v523 = vld [vmem:[%s11 + $0xc] sm:$0xf]
    %v524 = vld [vmem:[%s12] sm:$0xf]
    %v526 = vsel %vm89, %v524, 0
    %528 = vmatpush.bf16.msra.mxu0 0
    %529 = vmatpush.bf16.msra.mxu0 0
    %530 = vmatpush.bf16.msra.mxu0 0
    %531 = vmatpush.bf16.msra.mxu0 0
    %532 = vmatpush.bf16.msra.mxu0 0
    %533 = vmatpush.bf16.msra.mxu0 0
    %534 = vmatpush.bf16.msra.mxu0 0
    %535 = vmatpush.bf16.msra.mxu0 %v526
    %536 = vmatmul.bf16.gmra.mxu0 %v87
    %v537 = vpop.f32.mrf.mxu0
    %v538 = vadd.f32 0.0, %v537
    %v539 = vpop.f32.mrf.mxu0
    %v540 = vadd.f32 0.0, %v539
    %541 = vdwg.mxu0
    %v546 = vunpack.c.l.b16 %v520
    %v547 = vunpack.c.l.b16 %v521
    %v548 = vunpack.c.l.b16 %v522
    %v549 = vunpack.c.l.b16 %v523
    %v550 = vpack.c.b16 %v547, %v546
    %v551 = vpack.c.b16 %v549, %v548
    %vm554 = vcmask 261120
    %v556 = vsel %vm554, %v519, 0
    %558 = vmatpush.bf16.msra.mxu0 0
    %559 = vmatpush.bf16.msra.mxu0 0
    %560 = vmatpush.bf16.msra.mxu0 0
    %561 = vmatpush.bf16.msra.mxu0 0
    %562 = vmatpush.bf16.msra.mxu0 0
    %563 = vmatpush.bf16.msra.mxu0 0
    %564 = vmatpush.bf16.msra.mxu0 %v551
    %565 = vmatpush.bf16.msra.mxu0 %v550
    %566 = vmatmul.bf16.gmra.mxu0 %v556
    %v567 = vpop.f32.mrf.mxu0
    %v568 = vadd.f32 %v538, %v567
    %v569 = vpop.f32.mrf.mxu0
    %v570 = vadd.f32 %v540, %v569
    %571 = vdwg.mxu0
    %v572 = vld [vmem:[%s13] sm:$0x1]
    %v574 = vperm.slane %v572, 0
    %v576 = vadd.f32 %v568, %v574
    %v577 = vadd.f32 %v570, %v574
    %v578 = vmax.f32 %v576, 0.0
    %v579 = vmax.f32 %v577, 0.0
    %v580 = vpack.c.bf16 %v579, %v578
    %v581 = vld [vmem:[%s14] sm:$0xf]
    %v582 = vld [vmem:[%s14 + $0x4] sm:$0xf]
    %v583 = vld [vmem:[%s15] sm:$0x1]
    %v585 = vperm.slane %v583, 0
    %v589 = vunpack.c.l.b16 %v581
    %v590 = vunpack.c.l.b16 %v582
    %v591 = vpack.c.b16 %v590, %v589
    %vm593 = vcmask 130048
    %v595 = vsel %vm593, %v580, 0
    %597 = vmatpush.bf16.msra.mxu0 0
    %598 = vmatpush.bf16.msra.mxu0 0
    %599 = vmatpush.bf16.msra.mxu0 0
    %600 = vmatpush.bf16.msra.mxu0 0
    %601 = vmatpush.bf16.msra.mxu0 0
    %602 = vmatpush.bf16.msra.mxu0 0
    %603 = vmatpush.bf16.msra.mxu0 0
    %604 = vmatpush.bf16.msra.mxu0 %v591
    %605 = vmatmul.bf16.gmra.mxu0 %v595
    %v606 = vpop.f32.mrf.mxu0
    %v607 = vadd.f32 %v585, %v606
    %v608 = vpop.f32.mrf.mxu0
    %v609 = vadd.f32 %v585, %v608
    %610 = vdwg.mxu0
    %611 = vst [vmem:[%s16] sm:$0xff] %v607
    %612 = vst [vmem:[%s16 + $0x8] sm:$0xff] %v609
    // Predicated region
    $region70: #{cnn_regressor_forward.1} parent=1 // pred_check
      _
    $region71: #{cnn_regressor_forward.1} parent=1 // pred_check_branch
      %614 = sbr.rel (0) target = $region73
    $region72: #{cnn_regressor_forward.1} parent=1 // pred_region
      _
    $region73: #{cnn_regressor_forward.1} parent=1 // pred_fallthru
      _
    // Predicated region
    $region74: #{cnn_regressor_forward.1} parent=1 // pred_check
      _
    $region75: #{cnn_regressor_forward.1} parent=1 // pred_check_branch
      %616 = sbr.rel (0) target = $region77
    $region76: #{cnn_regressor_forward.1} parent=1 // pred_region
      _
    $region77: #{cnn_regressor_forward.1} parent=1 // pred_fallthru
      _
    %617 = vsyncpa [#allocation3], 1

</llo_original>
